<compile_context>
chip_gen: v7x
topology: tpu7x:2x2x1
jax: 0.10.0
libtpu: 0.0.40
codegen_flags: <defaults>
</compile_context>

<pallas_src>
import functools

import jax
import jax.numpy as jnp
from jax.experimental import pallas as pl
from jax.experimental.pallas import tpu as pltpu


_LANE = 128
_MIN_KERNEL_ELEMS = 1 << 16   # below this, plain XLA add beats kernel launch cost


def _round_up(x, m):
    return -(-x // m) * m


def _round_down(x, m):
    return (x // m) * m


def _sublane(dtype) -> int:
    """Native packed sublane tile: 8 (32-bit), 16 (bf16/fp16), 32 (int8/fp8)."""
    bits = jnp.dtype(dtype).itemsize * 8
    return max(8, 256 // bits)


@functools.lru_cache(maxsize=1)
def _chip_config():
    """(block_bytes, vmem_limit_bytes, n_tensorcores) — chip-generation aware."""
    kind = ""
    try:
        kind = jax.devices()[0].device_kind.lower()
    except Exception:  # defensive: fall back to conservative defaults
        pass
    if "v7" in kind:
        # 2 TCs/chip, only 64 MiB physical VMEM: 8 MiB blocks -> 32 MiB pipelined.
        return 8 << 20, 48 << 20, 2
    if "v6" in kind:
        # 1 TC, 128 MiB VMEM (32 MiB scoped default): 4 MiB blocks -> 16 MiB.
        return 4 << 20, 32 << 20, 1
    # v5e / unknown: 2 MiB blocks (8 MiB pipelined), explicit limit for headroom.
    return 2 << 20, 32 << 20, 1


def _add_one_kernel(x_ref, o_ref):
    # Hot path: one VPU add over the whole VMEM tile.
    o_ref[...] = x_ref[...] + jnp.asarray(1, dtype=o_ref.dtype)


def _add_one_tiled(x2d, sublane, block_bytes=None):
    """Elementwise +1 over a 2-D array.

    Block dims are either (sublane, 128)-aligned or span the full array extent,
    so partial edge blocks are legal and simply clipped by Pallas.
    """
    R, C = x2d.shape
    itemsize = jnp.dtype(x2d.dtype).itemsize
    cfg_block, vmem_limit, n_cores = _chip_config()
    if block_bytes is None:
        block_bytes = cfg_block

    if C % _LANE == 0 and C * sublane * itemsize > block_bytes:
        # Very wide lane-aligned rows: tile the lane axis too (big multiple of
        # 128; a partial edge column-block is clipped).
        tr = sublane
        tc = max(_LANE, _round_down(block_bytes // (sublane * itemsize), _LANE))
    else:
        # Full-width rows: contiguous DMA bursts, unmasked lane-dense stores.
        # (Also the only legal tiling when C is not a multiple of 128.)
        tc = C
        tr = max(sublane, _round_down(block_bytes // (C * itemsize), sublane))

    # Multi-TensorCore chips (v7x): ensure >= 2 blocks per core so the
    # "parallel" grid axes actually shard and each core's DMAs pipeline.
    if n_cores > 1:
        want = 2 * n_cores
        if pl.cdiv(R, tr) * pl.cdiv(C, tc) < want and R >= want * sublane:
            tr = max(sublane, _round_down(R // want, sublane))

    # If the array is smaller than a block, shrink to the full extent (legal:
    # block dim == full array dim).
    tr = min(tr, R)
    tc = min(tc, C)

    grid = (pl.cdiv(R, tr), pl.cdiv(C, tc))
    return pl.pallas_call(
        _add_one_kernel,
        out_shape=jax.ShapeDtypeStruct((R, C), x2d.dtype),
        grid_spec=pltpu.PrefetchScalarGridSpec(
            num_scalar_prefetch=0,
            grid=grid,
            in_specs=[pl.BlockSpec((tr, tc), lambda i, j: (i, j))],
            out_specs=pl.BlockSpec((tr, tc), lambda i, j: (i, j)),
        ),
        compiler_params=pltpu.CompilerParams(
            dimension_semantics=("parallel", "parallel"),
            vmem_limit_bytes=vmem_limit,
        ),
        cost_estimate=pl.CostEstimate(
            flops=R * C,
            transcendentals=0,
            bytes_accessed=2 * R * C * itemsize,
        ),
    )(x2d)


def xv_forward(x, *, force_kernel=False):
    """JAX/Pallas equivalent of Xv.forward: returns x + 1, same shape/dtype."""
    x = jnp.asarray(x)
    shape = x.shape
    n = int(x.size)
    one = jnp.asarray(1, dtype=x.dtype)

    # Tiny inputs (incl. the reference 0-d tensor): kernel launch + DMA overhead
    # dwarfs a single fused XLA add.
    if n == 0 or (not force_kernel and n < _MIN_KERNEL_ELEMS):
        return x + one

    sub = _sublane(x.dtype)
    itemsize = jnp.dtype(x.dtype).itemsize
    block_bytes, _, _ = _chip_config()

    # Fast path A: >=2-D with a reasonably wide last dim. Leading dims collapse
    # to a zero-copy (rows, C) view; partial row blocks are clipped by Pallas,
    # so there is no padding, no scatter and no final slice.
    if x.ndim >= 2 and shape[-1] >= _LANE:
        C = shape[-1]
        if C % _LANE == 0 or C * sub * itemsize <= 2 * block_bytes:
            y2d = _add_one_tiled(x.reshape(n // C, C), sub)
            return y2d.reshape(shape)

    # Fast path B: any shape whose element count is lane-divisible -> flat
    # zero-copy (rows, C) view with a lane-dense C (still no padding).
    if n % _LANE == 0:
        C = _LANE
        for cand in (8192, 4096, 2048, 1024, 512, 256, 128):
            if n % cand == 0 and n // cand >= sub:
                C = cand
                break
        else:
            for cand in (8192, 4096, 2048, 1024, 512, 256, 128):
                if n % cand == 0:
                    C = cand
                    break
        y2d = _add_one_tiled(x.reshape(n // C, C), sub)
        return y2d.reshape(shape)

    # Ragged leftovers (last dim < 128 and n not lane-divisible): the old
    # pad + slice path ~tripled HBM traffic, so let XLA emit the fused add.
    return x + one


if __name__ == "__main__":
    # Reference input from the PyTorch spec: torch.tensor(1.0) -> expect 2.0.
    scalar_out = jax.block_until_ready(xv_forward(jnp.float32(1.0)))
    assert scalar_out.shape == ()
    assert jnp.allclose(scalar_out, 2.0), scalar_out

    key = jax.random.PRNGKey(0)
    k1, k2, k3, k4 = jax.random.split(key, 4)

    # Small 4-D input (batch=2, channels=4, 16x16 spatial): last dim < 128 but
    # element count is lane-divisible -> flat zero-copy kernel path.
    x = jax.random.normal(k1, (2, 4, 16, 16), dtype=jnp.float32)
    y = jax.block_until_ready(xv_forward(x, force_kernel=True))
    assert y.shape == x.shape and y.dtype == x.dtype
    assert jnp.allclose(y, x + 1.0, atol=1e-6)

    # Lane-aligned 3-D input -> zero-copy (rows, C) fast path.
    x2 = jax.random.normal(k2, (2, 8, 256), dtype=jnp.float32)
    y2 = jax.block_until_ready(xv_forward(x2, force_kernel=True))
    assert y2.shape == x2.shape
    assert jnp.allclose(y2, x2 + 1.0, atol=1e-6)

    # bf16 exercises the dtype-aware (16, 128) packed-sublane tiling.
    x3 = jax.random.normal(k3, (32, 256), dtype=jnp.bfloat16)
    y3 = jax.block_until_ready(xv_forward(x3, force_kernel=True))
    assert y3.dtype == jnp.bfloat16
    assert jnp.allclose(y3.astype(jnp.float32),
                        x3.astype(jnp.float32) + 1.0, atol=1e-2)

    # Ragged last dim (>=128, not a multiple of 128) -> full-extent-C block,
    # no padding or slicing.
    x4 = jax.random.normal(k4, (24, 200), dtype=jnp.float32)
    y4 = jax.block_until_ready(xv_forward(x4, force_kernel=True))
    assert jnp.allclose(y4, x4 + 1.0, atol=1e-6)

    # Partial edge block: 44 rows with an 8-row block -> 6 grid steps, last one
    # clipped by Pallas (forced tiny block to exercise the multi-step grid).
    x5 = jax.random.normal(k1, (44, 256), dtype=jnp.float32)
    y5 = jax.block_until_ready(
        _add_one_tiled(x5, _sublane(x5.dtype), block_bytes=8 * 256 * 4))
    assert jnp.allclose(y5, x5 + 1.0, atol=1e-6)

    print("KERNEL_OK")
</pallas_src>

<mosaic_0001>
module attributes {stable_mosaic.version = 11 : i64} {
  func.func @_add_one_kernel(%arg0: i32, %arg1: i32, %arg2: memref<8x256xf32, #tpu.memory_space<vmem>>, %arg3: memref<8x256xf32, #tpu.memory_space<vmem>>) attributes {dimension_semantics = [#tpu.dimension_semantics<parallel>, #tpu.dimension_semantics<parallel>], iteration_bounds = array<i64: 1, 1>, scalar_prefetch = 0 : i64, scratch_operands = 0 : i64, tpu.core_type = #tpu.core_type<tc>, window_params = [{transform_indices = @transform_0, window_bounds = array<i64: 8, 256>}, {transform_indices = @transform_1, window_bounds = array<i64: 8, 256>}]} {
    %c0 = arith.constant 0 : index
    %c0_0 = arith.constant 0 : index
    %0 = vector.load %arg2[%c0, %c0_0] : memref<8x256xf32, #tpu.memory_space<vmem>>, vector<8x256xf32>
    %cst = arith.constant 1.000000e+00 : f32
    %1 = vector.broadcast %cst : f32 to vector<8x256xf32>
    %2 = arith.addf %0, %1 : vector<8x256xf32>
    %c0_1 = arith.constant 0 : index
    %c0_2 = arith.constant 0 : index
    %3 = vector.load %arg3[%c0_1, %c0_2] : memref<8x256xf32, #tpu.memory_space<vmem>>, vector<8x256xf32>
    tpu.vector_store %arg3[%c0_1, %c0_2], %2 {strides = array<i32>} : memref<8x256xf32, #tpu.memory_space<vmem>>, vector<8x256xf32>,
    return
  }
  func.func @transform_0(%arg0: i32, %arg1: i32) -> (i32, i32) {
    %c0_i32 = arith.constant 0 : i32
    return %arg0, %arg1 : i32, i32
  }
  func.func @transform_1(%arg0: i32, %arg1: i32) -> (i32, i32) {
    %c0_i32 = arith.constant 0 : i32
    return %arg0, %arg1 : i32, i32
  }
}

</mosaic_0001>

<llo_original>
// kernel: tpu_custom_call.1
$region0: #{tpu_custom_call.1}
  #allocation0 [shape = 'u32[]', space=smem, size = 0x4, offset = 0x4, fixed_abs, tag = 'smem constant byte address 0x4 - core index']
  #allocation1 [shape = 'u32[144,128]{1,0:T(1,128)}', space=vmem, size = 0x12000, scoped, tag = 'internal scratch']
  %s0 = inlined_call_operand.hbm [shape: f32[8,256], index: 0, kind: input, shape index: {}]
  %s1 = inlined_call_operand.hbm [shape: f32[8,256], index: 1, kind: output, shape index: {}]
  %s2 = sld [smem:[#allocation0]]
  $region18: #{tpu_custom_call.1} parent=0
    _
  %s4 = ssub.s32 1, %s2
  %s5 = scalar_select 0, %s4, %s2
  $region1: #{tpu_custom_call.1} parent=0
    #allocation2 [shape = 'u8[8192]{0}', space=vmem, size = 0x2000, scoped, tag = 'input window, operand 0, single buffered']
    #allocation3 [shape = 's32[1]{0}', space=sflag, size = 0x4, scoped, tag = 'scoped memory for tpu_custom_call.1']
    #allocation4 [shape = 's32[1]{0}', space=sflag, size = 0x4, scoped, tag = 'scoped memory for tpu_custom_call.1']
    #allocation5 [shape = 'u8[8192]{0}', space=vmem, size = 0x2000, scoped, tag = 'output window, operand 0, single buffered']
    %6 = vsyncpa [#allocation3], 0
    %7 = vsyncpa [#allocation4], 0
    // Predicated region
    $region2: #{tpu_custom_call.1} parent=1 // pred_check
      _
    $region3: #{tpu_custom_call.1} parent=1 // pred_check_branch
      %9 = sbr.rel (0) target = $region5
    $region4: #{tpu_custom_call.1} parent=1 // pred_region
      %s11 = ssub.s32 256, 256
      %12 = vsyncadd [#allocation3], %s11
      %s14 = sshll.u32 [#allocation2], 4
      %s15 = int_to_ptr.vmem [resolvable:$true] %s14
      %17 = dma.hbm_to_vmem [thread:$0]  %s0, 256, %s15, [#allocation3]
    $region5: #{tpu_custom_call.1} parent=1 // pred_fallthru
      _
    // Predicated region
    $region6: #{tpu_custom_call.1} parent=1 // pred_check
      _
    $region7: #{tpu_custom_call.1} parent=1 // pred_check_branch
      %19 = sbr.rel (0) target = $region9
    $region8: #{tpu_custom_call.1} parent=1 // pred_region
      %20 = dma.done [#allocation3], 256
    $region9: #{tpu_custom_call.1} parent=1 // pred_fallthru
      _
    %v21 = vld [vmem:[#allocation2] sm:$0xff]
    %v22 = vld [vmem:[#allocation2 + $0x8] sm:$0xff]
    %v23 = vadd.f32 %v21, 1.0
    %v24 = vadd.f32 %v22, 1.0
    %25 = vst [vmem:[#allocation5] sm:$0xff] %v23
    %26 = vst [vmem:[#allocation5 + $0x8] sm:$0xff] %v24
    // Predicated region
    $region10: #{tpu_custom_call.1} parent=1 // pred_check
      _
    $region11: #{tpu_custom_call.1} parent=1 // pred_check_branch
      %28 = sbr.rel (0) target = $region13
    $region12: #{tpu_custom_call.1} parent=1 // pred_region
      %s30 = ssub.s32 256, 256
      %31 = vsyncadd [#allocation4], %s30
      %s33 = sshll.u32 [#allocation5], 4
      %s34 = int_to_ptr.vmem [resolvable:$true] %s33
      %36 = dma.vmem_to_hbm [thread:$0]  %s34, 256, %s1, [#allocation4]
    $region13: #{tpu_custom_call.1} parent=1 // pred_fallthru
      _
    // Predicated region
    $region14: #{tpu_custom_call.1} parent=1 // pred_check
      _
    $region15: #{tpu_custom_call.1} parent=1 // pred_check_branch
      %38 = sbr.rel (0) target = $region17
    $region16: #{tpu_custom_call.1} parent=1 // pred_region
      %39 = dma.done [#allocation4], 256
    $region17: #{tpu_custom_call.1} parent=1 // pred_fallthru
      _
    %40 = vsyncpa [#allocation3], 1
    %41 = vsyncpa [#allocation4], 1

</llo_original>
